<compile_context>
chip_gen: v6e
topology: v6e:2x2x1
jax: 0.10.0
libtpu: 0.0.40
codegen_flags: <defaults>
</compile_context>

<pallas_src>
import jax
import jax.numpy as jnp
from jax.experimental import pallas as pl
from jax.experimental.pallas import tpu as pltpu


def _round_up(n, m):
    return ((n + m - 1) // m) * m


def dueling_kernel(x_ref,
                   w_h0, b_h0, w_h1, b_h1,      # hidden trunk (2x Linear+ReLU)
                   w_br, b_br,                  # fused adv/val first layers
                   w_q, b_q,                    # fused adv_out + val_out + combine
                   out_ref):
    f32 = jnp.float32
    bf16 = jnp.bfloat16

    # hidden trunk: Linear -> ReLU (x2). bf16 MXU inputs, f32 accumulate;
    # bias/ReLU stay f32 (v5e-safe elementwise path).
    x = x_ref[...].astype(bf16)
    h = jnp.dot(x, w_h0[...], preferred_element_type=f32) + b_h0[...]
    h = jnp.maximum(h, 0.0)
    h = jnp.dot(h.astype(bf16), w_h1[...], preferred_element_type=f32) + b_h1[...]
    h = jnp.maximum(h, 0.0)

    # fused branch first layers: one matmul produces [adv_hidden | val_hidden].
    br = jnp.dot(h.astype(bf16), w_br[...], preferred_element_type=f32) + b_br[...]
    br = jnp.maximum(br, 0.0)                       # (TB, adv_h + val_h) f32

    # fused Q head: W_q/b_q already encode  V + A - mean(A)  (and zero the
    # padded lanes), so the epilogue is one lane-dense matmul + store.
    q = jnp.dot(br.astype(bf16), w_q[...], preferred_element_type=f32) + b_q[...]
    out_ref[...] = q.astype(out_ref.dtype)          # bf16 lane-dense store


def dueling_forward(x, kparams, output_size, *, tb=512, out_dtype=jnp.bfloat16):
    """x: (B, input_size) f32 or bf16; kparams: output of prepare_kernel_params."""
    batch, input_size = x.shape
    out_pad = kparams[-2].shape[1]                 # w_q: (adv_h+val_h, OUT_PAD)

    # Batch tile: big to amortize the ~0.35us/step fixed cost, but don't
    # over-pad tiny batches.
    tb = min(tb, _round_up(batch, 8))
    b_pad = _round_up(batch, tb)
    if b_pad != batch:
        x = jnp.pad(x, ((0, b_pad - batch), (0, 0)))
    grid = (b_pad // tb,)

    in_specs = [pl.BlockSpec((tb, input_size), lambda i: (i, 0))]  # x: batch-tiled
    # weights / biases: whole-array blocks, constant index_map -> VMEM-resident.
    for p in kparams:
        in_specs.append(pl.BlockSpec(p.shape, lambda i: (0, 0)))

    # Advisory cost estimate (mem-bound, tiny flops) for the XLA scheduler.
    h0 = kparams[0].shape[1]
    h1 = kparams[2].shape[1]
    br_w = kparams[4].shape[1]
    flops = 2 * b_pad * (input_size * h0 + h0 * h1 + h1 * br_w + br_w * out_pad)
    bytes_accessed = (int(x.size) * x.dtype.itemsize
                      + b_pad * out_pad * jnp.dtype(out_dtype).itemsize
                      + sum(int(p.size) * p.dtype.itemsize for p in kparams))

    q_pad = pl.pallas_call(
        dueling_kernel,
        grid=grid,
        in_specs=in_specs,
        out_specs=pl.BlockSpec((tb, out_pad), lambda i: (i, 0)),
        out_shape=jax.ShapeDtypeStruct((b_pad, out_pad), out_dtype),
        compiler_params=pltpu.CompilerParams(
            dimension_semantics=("parallel",)),
        cost_estimate=pl.CostEstimate(flops=flops, transcendentals=0,
                                      bytes_accessed=bytes_accessed),
    )(x, *kparams)
    # Slice off batch/lane padding; cast fuses with the slice on the tiny view.
    return q_pad[:batch, :output_size].astype(jnp.float32)


# ----------------------- parameters & references ---------------------------

def _linear_params(key, fan_in, fan_out):
    """PyTorch-style init U(-1/sqrt(fan_in), 1/sqrt(fan_in)).
    W is (fan_in, fan_out); b is (1, fan_out)."""
    kw, kb = jax.random.split(key)
    bound = 1.0 / jnp.sqrt(float(fan_in))
    w = jax.random.uniform(kw, (fan_in, fan_out), jnp.float32, -bound, bound)
    b = jax.random.uniform(kb, (1, fan_out), jnp.float32, -bound, bound)
    return w, b


def make_params(key, input_size, hidden_sizes, adv_sizes, val_sizes, output_size):
    keys = jax.random.split(key, 6)
    params = []
    sizes = [input_size] + hidden_sizes
    for i in range(len(hidden_sizes)):
        params += list(_linear_params(keys[i], sizes[i], sizes[i + 1]))
    asizes = [hidden_sizes[-1]] + adv_sizes
    for i in range(len(adv_sizes)):
        params += list(_linear_params(keys[2 + i], asizes[i], asizes[i + 1]))
    params += list(_linear_params(keys[3], adv_sizes[-1], output_size))
    vsizes = [hidden_sizes[-1]] + val_sizes
    for i in range(len(val_sizes)):
        params += list(_linear_params(keys[4 + i], vsizes[i], vsizes[i + 1]))
    params += list(_linear_params(keys[5], val_sizes[-1], 1))
    return params     # 12 arrays, all f32


def prepare_kernel_params(params, output_size):
    """Fuse branch first layers; fold val_out + dueling combine into adv_out;
    lane-pad the fused Q head; bf16-cast the MXU weights."""
    (w_h0, b_h0, w_h1, b_h1,
     w_a0, b_a0, w_ao, b_ao,
     w_v0, b_v0, w_vo, b_vo) = params
    bf16 = jnp.bfloat16
    adv_h = w_a0.shape[1]
    val_h = w_v0.shape[1]
    out_pad = _round_up(output_size, 128)

    # fused branch first layer: lanes [0:adv_h] = adv, [adv_h:] = val.
    w_br = jnp.concatenate([w_a0, w_v0], axis=1).astype(bf16)
    b_br = jnp.concatenate([b_a0, b_v0], axis=1)

    # Fused Q head:  Q = V + A - mean(A)  is affine in br = [adv_relu|val_relu]:
    #   adv rows:  W_ao[k, j] - mean_j'(W_ao[k, j'])
    #   val rows:  w_vo[k] broadcast across the real output lanes
    #   bias:      b_ao[j] - mean(b_ao) + b_vo
    # Padded lanes (>= output_size) are exactly zero.
    w_q_adv = w_ao - jnp.mean(w_ao, axis=1, keepdims=True)        # (adv_h, out)
    w_q_val = jnp.broadcast_to(w_vo, (val_h, output_size))        # w_vo: (val_h, 1)
    w_q = jnp.zeros((adv_h + val_h, out_pad), jnp.float32)
    w_q = w_q.at[:adv_h, :output_size].set(w_q_adv)
    w_q = w_q.at[adv_h:, :output_size].set(w_q_val)
    w_q = w_q.astype(bf16)

    b_q = jnp.zeros((1, out_pad), jnp.float32)
    b_q = b_q.at[:, :output_size].set(b_ao - jnp.mean(b_ao) + b_vo[0, 0])

    return [w_h0.astype(bf16), b_h0, w_h1.astype(bf16), b_h1,
            w_br, b_br, w_q, b_q]


def reference_forward(x, params):
    """Pure-f32 reference matching the PyTorch module exactly."""
    (w_h0, b_h0, w_h1, b_h1, w_a0, b_a0, w_ao, b_ao,
     w_v0, b_v0, w_vo, b_vo) = params
    h = jax.nn.relu(x @ w_h0 + b_h0)
    h = jax.nn.relu(h @ w_h1 + b_h1)
    adv = jax.nn.relu(h @ w_a0 + b_a0)
    adv = adv @ w_ao + b_ao
    val = jax.nn.relu(h @ w_v0 + b_v0)
    val = val @ w_vo + b_vo
    return val + adv - jnp.mean(adv, axis=-1, keepdims=True)


def reference_kernel_math(x, kparams, output_size):
    """Pure-JAX replication of the kernel's exact recipe (bf16 MXU inputs,
    f32 accumulate, fused/pre-combined Q head, bf16 output store)."""
    w_h0, b_h0, w_h1, b_h1, w_br, b_br, w_q, b_q = kparams
    bf16, f32 = jnp.bfloat16, jnp.float32
    dot = lambda a, w: jnp.dot(a.astype(bf16), w, preferred_element_type=f32)
    h = jnp.maximum(dot(x, w_h0) + b_h0, 0.0)
    h = jnp.maximum(dot(h, w_h1) + b_h1, 0.0)
    br = jnp.maximum(dot(h, w_br) + b_br, 0.0)
    q = dot(br, w_q) + b_q
    return q.astype(jnp.bfloat16)[:, :output_size].astype(jnp.float32)


if __name__ == "__main__":
    key = jax.random.PRNGKey(0)
    kx, kp = jax.random.split(key)

    # small, module-consistent sizes
    batch = 24
    input_size = 32
    hidden_sizes = [64, 32]
    adv_sizes = [32]
    val_sizes = [32]
    output_size = 8

    x = jax.random.normal(kx, (batch, input_size), jnp.float32)
    params = make_params(kp, input_size, hidden_sizes, adv_sizes,
                         val_sizes, output_size)
    kparams = prepare_kernel_params(params, output_size)

    # default tile (grid collapses to 1 step for this tiny batch)
    out = dueling_forward(x, kparams, output_size)
    out = jax.block_until_ready(out)
    assert out.shape == (batch, output_size)

    # small explicit tile to exercise a multi-step pipelined grid (3 steps)
    out_tiled = dueling_forward(x, kparams, output_size, tb=8)
    out_tiled = jax.block_until_ready(out_tiled)
    assert out_tiled.shape == (batch, output_size)

    # tight check against a reference using the same bf16/f32 compute recipe
    ref_bf16 = reference_kernel_math(x, kparams, output_size)
    assert jnp.allclose(out, ref_bf16, atol=2e-3, rtol=2e-3), "bf16-math mismatch"
    assert jnp.allclose(out_tiled, ref_bf16, atol=2e-3, rtol=2e-3), \
        "tiled bf16-math mismatch"

    # loose check against the exact f32 PyTorch-module semantics
    ref_f32 = reference_forward(x, params)
    assert jnp.allclose(out, ref_f32, atol=5e-2, rtol=5e-2), "f32 semantics mismatch"

    print("KERNEL_OK")
</pallas_src>

<mosaic_0001>
module attributes {stable_mosaic.version = 11 : i64} {
  func.func @dueling_kernel(%arg0: i32, %arg1: memref<24x32xf32, #tpu.memory_space<vmem>>, %arg2: memref<32x64xbf16, #tpu.memory_space<vmem>>, %arg3: memref<1x64xf32, #tpu.memory_space<vmem>>, %arg4: memref<64x32xbf16, #tpu.memory_space<vmem>>, %arg5: memref<1x32xf32, #tpu.memory_space<vmem>>, %arg6: memref<32x64xbf16, #tpu.memory_space<vmem>>, %arg7: memref<1x64xf32, #tpu.memory_space<vmem>>, %arg8: memref<64x128xbf16, #tpu.memory_space<vmem>>, %arg9: memref<1x128xf32, #tpu.memory_space<vmem>>, %arg10: memref<24x128xbf16, #tpu.memory_space<vmem>>) attributes {dimension_semantics = [#tpu.dimension_semantics<parallel>], iteration_bounds = array<i64: 1>, scalar_prefetch = 0 : i64, scratch_operands = 0 : i64, tpu.core_type = #tpu.core_type<tc>, window_params = [{transform_indices = @transform_0, window_bounds = array<i64: 24, 32>}, {pipeline_mode = #tpu.pipeline_mode<synchronous>, transform_indices = @transform_1, window_bounds = array<i64: 32, 64>}, {pipeline_mode = #tpu.pipeline_mode<synchronous>, transform_indices = @transform_2, window_bounds = array<i64: 1, 64>}, {pipeline_mode = #tpu.pipeline_mode<synchronous>, transform_indices = @transform_3, window_bounds = array<i64: 64, 32>}, {pipeline_mode = #tpu.pipeline_mode<synchronous>, transform_indices = @transform_4, window_bounds = array<i64: 1, 32>}, {pipeline_mode = #tpu.pipeline_mode<synchronous>, transform_indices = @transform_5, window_bounds = array<i64: 32, 64>}, {pipeline_mode = #tpu.pipeline_mode<synchronous>, transform_indices = @transform_6, window_bounds = array<i64: 1, 64>}, {pipeline_mode = #tpu.pipeline_mode<synchronous>, transform_indices = @transform_7, window_bounds = array<i64: 64, 128>}, {pipeline_mode = #tpu.pipeline_mode<synchronous>, transform_indices = @transform_8, window_bounds = array<i64: 1, 128>}, {transform_indices = @transform_9, window_bounds = array<i64: 24, 128>}]} {
    %c0 = arith.constant 0 : index
    %c0_0 = arith.constant 0 : index
    %0 = vector.load %arg1[%c0, %c0_0] : memref<24x32xf32, #tpu.memory_space<vmem>>, vector<24x32xf32>
    %1 = arith.truncf %0 : vector<24x32xf32> to vector<24x32xbf16>
    %c0_1 = arith.constant 0 : index
    %c0_2 = arith.constant 0 : index
    %2 = vector.load %arg2[%c0_1, %c0_2] : memref<32x64xbf16, #tpu.memory_space<vmem>>, vector<32x64xbf16>
    %cst = arith.constant dense<0.000000e+00> : vector<24x64xf32>
    %3 = tpu.matmul %1, %2, %cst {dimension_numbers = #tpu.dot_dimension_numbers<[1], [0], [0], [1], [0, 0, 1, 1], [], []>} : vector<24x32xbf16>, vector<32x64xbf16>, vector<24x64xf32> -> vector<24x64xf32>
    %c0_3 = arith.constant 0 : index
    %c0_4 = arith.constant 0 : index
    %4 = vector.load %arg3[%c0_3, %c0_4] : memref<1x64xf32, #tpu.memory_space<vmem>>, vector<1x64xf32>
    %5 = vector.broadcast %4 : vector<1x64xf32> to vector<24x64xf32>
    %6 = arith.addf %3, %5 : vector<24x64xf32>
    %cst_5 = arith.constant 0.000000e+00 : f32
    %7 = vector.broadcast %cst_5 : f32 to vector<24x64xf32>
    %8 = arith.maximumf %6, %7 : vector<24x64xf32>
    %9 = arith.truncf %8 : vector<24x64xf32> to vector<24x64xbf16>
    %c0_6 = arith.constant 0 : index
    %c0_7 = arith.constant 0 : index
    %10 = vector.load %arg4[%c0_6, %c0_7] : memref<64x32xbf16, #tpu.memory_space<vmem>>, vector<64x32xbf16>
    %cst_8 = arith.constant dense<0.000000e+00> : vector<24x32xf32>
    %11 = tpu.matmul %9, %10, %cst_8 {dimension_numbers = #tpu.dot_dimension_numbers<[1], [0], [0], [1], [0, 0, 1, 1], [], []>} : vector<24x64xbf16>, vector<64x32xbf16>, vector<24x32xf32> -> vector<24x32xf32>
    %c0_9 = arith.constant 0 : index
    %c0_10 = arith.constant 0 : index
    %12 = vector.load %arg5[%c0_9, %c0_10] : memref<1x32xf32, #tpu.memory_space<vmem>>, vector<1x32xf32>
    %13 = vector.broadcast %12 : vector<1x32xf32> to vector<24x32xf32>
    %14 = arith.addf %11, %13 : vector<24x32xf32>
    %cst_11 = arith.constant 0.000000e+00 : f32
    %15 = vector.broadcast %cst_11 : f32 to vector<24x32xf32>
    %16 = arith.maximumf %14, %15 : vector<24x32xf32>
    %17 = arith.truncf %16 : vector<24x32xf32> to vector<24x32xbf16>
    %c0_12 = arith.constant 0 : index
    %c0_13 = arith.constant 0 : index
    %18 = vector.load %arg6[%c0_12, %c0_13] : memref<32x64xbf16, #tpu.memory_space<vmem>>, vector<32x64xbf16>
    %cst_14 = arith.constant dense<0.000000e+00> : vector<24x64xf32>
    %19 = tpu.matmul %17, %18, %cst_14 {dimension_numbers = #tpu.dot_dimension_numbers<[1], [0], [0], [1], [0, 0, 1, 1], [], []>} : vector<24x32xbf16>, vector<32x64xbf16>, vector<24x64xf32> -> vector<24x64xf32>
    %c0_15 = arith.constant 0 : index
    %c0_16 = arith.constant 0 : index
    %20 = vector.load %arg7[%c0_15, %c0_16] : memref<1x64xf32, #tpu.memory_space<vmem>>, vector<1x64xf32>
    %21 = vector.broadcast %20 : vector<1x64xf32> to vector<24x64xf32>
    %22 = arith.addf %19, %21 : vector<24x64xf32>
    %cst_17 = arith.constant 0.000000e+00 : f32
    %23 = vector.broadcast %cst_17 : f32 to vector<24x64xf32>
    %24 = arith.maximumf %22, %23 : vector<24x64xf32>
    %25 = arith.truncf %24 : vector<24x64xf32> to vector<24x64xbf16>
    %c0_18 = arith.constant 0 : index
    %c0_19 = arith.constant 0 : index
    %26 = vector.load %arg8[%c0_18, %c0_19] : memref<64x128xbf16, #tpu.memory_space<vmem>>, vector<64x128xbf16>
    %cst_20 = arith.constant dense<0.000000e+00> : vector<24x128xf32>
    %27 = tpu.matmul %25, %26, %cst_20 {dimension_numbers = #tpu.dot_dimension_numbers<[1], [0], [0], [1], [0, 0, 1, 1], [], []>} : vector<24x64xbf16>, vector<64x128xbf16>, vector<24x128xf32> -> vector<24x128xf32>
    %c0_21 = arith.constant 0 : index
    %c0_22 = arith.constant 0 : index
    %28 = vector.load %arg9[%c0_21, %c0_22] : memref<1x128xf32, #tpu.memory_space<vmem>>, vector<1x128xf32>
    %29 = vector.broadcast %28 : vector<1x128xf32> to vector<24x128xf32>
    %30 = arith.addf %27, %29 : vector<24x128xf32>
    %31 = arith.truncf %30 : vector<24x128xf32> to vector<24x128xbf16>
    %c0_23 = arith.constant 0 : index
    %c0_24 = arith.constant 0 : index
    %32 = vector.load %arg10[%c0_23, %c0_24] : memref<24x128xbf16, #tpu.memory_space<vmem>>, vector<24x128xbf16>
    tpu.vector_store %arg10[%c0_23, %c0_24], %31 {strides = array<i32>} : memref<24x128xbf16, #tpu.memory_space<vmem>>, vector<24x128xbf16>,
    return
  }
  func.func @transform_0(%arg0: i32) -> (i32, i32) {
    %c0_i32 = arith.constant 0 : i32
    %c0_i32_0 = arith.constant 0 : i32
    return %arg0, %c0_i32 : i32, i32
  }
  func.func @transform_1(%arg0: i32) -> (i32, i32) {
    %c0_i32 = arith.constant 0 : i32
    %c0_i32_0 = arith.constant 0 : i32
    %c0_i32_1 = arith.constant 0 : i32
    return %c0_i32, %c0_i32_0 : i32, i32
  }
  func.func @transform_2(%arg0: i32) -> (i32, i32) {
    %c0_i32 = arith.constant 0 : i32
    %c0_i32_0 = arith.constant 0 : i32
    %c0_i32_1 = arith.constant 0 : i32
    return %c0_i32, %c0_i32_0 : i32, i32
  }
  func.func @transform_3(%arg0: i32) -> (i32, i32) {
    %c0_i32 = arith.constant 0 : i32
    %c0_i32_0 = arith.constant 0 : i32
    %c0_i32_1 = arith.constant 0 : i32
    return %c0_i32, %c0_i32_0 : i32, i32
  }
  func.func @transform_4(%arg0: i32) -> (i32, i32) {
    %c0_i32 = arith.constant 0 : i32
    %c0_i32_0 = arith.constant 0 : i32
    %c0_i32_1 = arith.constant 0 : i32
    return %c0_i32, %c0_i32_0 : i32, i32
  }
  func.func @transform_5(%arg0: i32) -> (i32, i32) {
    %c0_i32 = arith.constant 0 : i32
    %c0_i32_0 = arith.constant 0 : i32
    %c0_i32_1 = arith.constant 0 : i32
    return %c0_i32, %c0_i32_0 : i32, i32
  }
  func.func @transform_6(%arg0: i32) -> (i32, i32) {
    %c0_i32 = arith.constant 0 : i32
    %c0_i32_0 = arith.constant 0 : i32
    %c0_i32_1 = arith.constant 0 : i32
    return %c0_i32, %c0_i32_0 : i32, i32
  }
  func.func @transform_7(%arg0: i32) -> (i32, i32) {
    %c0_i32 = arith.constant 0 : i32
    %c0_i32_0 = arith.constant 0 : i32
    %c0_i32_1 = arith.constant 0 : i32
    return %c0_i32, %c0_i32_0 : i32, i32
  }
  func.func @transform_8(%arg0: i32) -> (i32, i32) {
    %c0_i32 = arith.constant 0 : i32
    %c0_i32_0 = arith.constant 0 : i32
    %c0_i32_1 = arith.constant 0 : i32
    return %c0_i32, %c0_i32_0 : i32, i32
  }
  func.func @transform_9(%arg0: i32) -> (i32, i32) {
    %c0_i32 = arith.constant 0 : i32
    %c0_i32_0 = arith.constant 0 : i32
    return %arg0, %c0_i32 : i32, i32
  }
}

</mosaic_0001>

<llo_original>
// kernel: tpu_custom_call.1
$region0: #{tpu_custom_call.1}
  #allocation0 [shape = 'u32[]', space=smem, size = 0x4, offset = 0x4, fixed_abs, tag = 'smem constant byte address 0x4 - core index']
  #allocation1 [shape = 'u32[144,128]{1,0:T(1,128)}', space=vmem, size = 0x12000, scoped, tag = 'internal scratch']
  %s0 = inlined_call_operand.vmem [shape: f32[24,32], index: 0, kind: input, shape index: {}]
  %s1 = inlined_call_operand.hbm [shape: bf16[32,64], index: 1, kind: input, shape index: {}]
  %s2 = inlined_call_operand.vmem [shape: f32[1,64], index: 2, kind: input, shape index: {}]
  %s3 = inlined_call_operand.vmem [shape: bf16[64,32], index: 3, kind: input, shape index: {}]
  %s4 = inlined_call_operand.vmem [shape: f32[1,32], index: 4, kind: input, shape index: {}]
  %s5 = inlined_call_operand.hbm [shape: bf16[32,64], index: 5, kind: input, shape index: {}]
  %s6 = inlined_call_operand.vmem [shape: f32[1,64], index: 6, kind: input, shape index: {}]
  %s7 = inlined_call_operand.vmem [shape: bf16[64,128], index: 7, kind: input, shape index: {}]
  %s8 = inlined_call_operand.vmem [shape: f32[1,128], index: 8, kind: input, shape index: {}]
  %s9 = inlined_call_operand.hbm [shape: bf16[24,128], index: 9, kind: output, shape index: {}]
  %s10 = sld [smem:[#allocation0]]
  $region54: #{tpu_custom_call.1} parent=0
    _
  %s12 = ssub.s32 1, %s10
  %s13 = scalar_select 0, %s12, %s10
  $region1: #{tpu_custom_call.1} parent=0
    #allocation2 [shape = 'u8[8192]{0}', space=vmem, size = 0x2000, scoped, tag = 'input window, operand 1, single buffered']
    #allocation3 [shape = 's32[1]{0}', space=sflag, size = 0x4, scoped, tag = 'scoped memory for tpu_custom_call.1']
    #allocation4 [shape = 's32[1]{0}', space=sflag, size = 0x4, scoped, tag = 'scoped memory for tpu_custom_call.1']
    #allocation5 [shape = 'u8[8192]{0}', space=vmem, size = 0x2000, scoped, tag = 'input window, operand 5, single buffered']
    #allocation6 [shape = 's32[1]{0}', space=sflag, size = 0x4, scoped, tag = 'scoped memory for tpu_custom_call.1']
    #allocation7 [shape = 'u8[6144]{0}', space=vmem, size = 0x1800, scoped, tag = 'output window, operand 0, single buffered']
    %14 = vsyncpa [#allocation3], 0
    %15 = vsyncpa [#allocation6], 0
    %16 = vsyncpa [#allocation4], 0
    // Predicated region
    $region2: #{tpu_custom_call.1} parent=1 // pred_check
      _
    $region3: #{tpu_custom_call.1} parent=1 // pred_check_branch
      %18 = sbr.rel (0) target = $region5
    $region4: #{tpu_custom_call.1} parent=1 // pred_region
      _
    $region5: #{tpu_custom_call.1} parent=1 // pred_fallthru
      _
    // Predicated region
    $region6: #{tpu_custom_call.1} parent=1 // pred_check
      _
    $region7: #{tpu_custom_call.1} parent=1 // pred_check_branch
      %20 = sbr.rel (0) target = $region9
    $region8: #{tpu_custom_call.1} parent=1 // pred_region
      %s22 = ssub.s32 256, 256
      %23 = vsyncadd [#allocation3], %s22
      %s24 = sshll.u32 [#allocation2], 4
      %s25 = int_to_ptr.vmem [resolvable:$true] %s24
      %30 = dma.hbm_to_vmem [thread:$0]  %s1, 256, %s25, [#allocation3], 64, 64, 4
    $region9: #{tpu_custom_call.1} parent=1 // pred_fallthru
      _
    // Predicated region
    $region10: #{tpu_custom_call.1} parent=1 // pred_check
      _
    $region11: #{tpu_custom_call.1} parent=1 // pred_check_branch
      %32 = sbr.rel (0) target = $region13
    $region12: #{tpu_custom_call.1} parent=1 // pred_region
      _
    $region13: #{tpu_custom_call.1} parent=1 // pred_fallthru
      _
    // Predicated region
    $region14: #{tpu_custom_call.1} parent=1 // pred_check
      _
    $region15: #{tpu_custom_call.1} parent=1 // pred_check_branch
      %34 = sbr.rel (0) target = $region17
    $region16: #{tpu_custom_call.1} parent=1 // pred_region
      _
    $region17: #{tpu_custom_call.1} parent=1 // pred_fallthru
      _
    // Predicated region
    $region18: #{tpu_custom_call.1} parent=1 // pred_check
      _
    $region19: #{tpu_custom_call.1} parent=1 // pred_check_branch
      %36 = sbr.rel (0) target = $region21
    $region20: #{tpu_custom_call.1} parent=1 // pred_region
      _
    $region21: #{tpu_custom_call.1} parent=1 // pred_fallthru
      _
    // Predicated region
    $region22: #{tpu_custom_call.1} parent=1 // pred_check
      _
    $region23: #{tpu_custom_call.1} parent=1 // pred_check_branch
      %38 = sbr.rel (0) target = $region25
    $region24: #{tpu_custom_call.1} parent=1 // pred_region
      %s40 = ssub.s32 256, 256
      %41 = vsyncadd [#allocation6], %s40
      %s42 = sshll.u32 [#allocation5], 4
      %s43 = int_to_ptr.vmem [resolvable:$true] %s42
      %48 = dma.hbm_to_vmem [thread:$0]  %s5, 256, %s43, [#allocation6], 64, 64, 4
    $region25: #{tpu_custom_call.1} parent=1 // pred_fallthru
      _
    // Predicated region
    $region26: #{tpu_custom_call.1} parent=1 // pred_check
      _
    $region27: #{tpu_custom_call.1} parent=1 // pred_check_branch
      %50 = sbr.rel (0) target = $region29
    $region28: #{tpu_custom_call.1} parent=1 // pred_region
      _
    $region29: #{tpu_custom_call.1} parent=1 // pred_fallthru
      _
    // Predicated region
    $region30: #{tpu_custom_call.1} parent=1 // pred_check
      _
    $region31: #{tpu_custom_call.1} parent=1 // pred_check_branch
      %52 = sbr.rel (0) target = $region33
    $region32: #{tpu_custom_call.1} parent=1 // pred_region
      _
    $region33: #{tpu_custom_call.1} parent=1 // pred_fallthru
      _
    // Predicated region
    $region34: #{tpu_custom_call.1} parent=1 // pred_check
      _
    $region35: #{tpu_custom_call.1} parent=1 // pred_check_branch
      %54 = sbr.rel (0) target = $region37
    $region36: #{tpu_custom_call.1} parent=1 // pred_region
      _
    $region37: #{tpu_custom_call.1} parent=1 // pred_fallthru
      _
    // Predicated region
    $region38: #{tpu_custom_call.1} parent=1 // pred_check
      _
    $region39: #{tpu_custom_call.1} parent=1 // pred_check_branch
      %56 = sbr.rel (0) target = $region41
    $region40: #{tpu_custom_call.1} parent=1 // pred_region
      %57 = dma.done [#allocation3], 256
    $region41: #{tpu_custom_call.1} parent=1 // pred_fallthru
      _
    // Predicated region
    $region42: #{tpu_custom_call.1} parent=1 // pred_check
      _
    $region43: #{tpu_custom_call.1} parent=1 // pred_check_branch
      %59 = sbr.rel (0) target = $region45
    $region44: #{tpu_custom_call.1} parent=1 // pred_region
      %60 = dma.done [#allocation6], 256
    $region45: #{tpu_custom_call.1} parent=1 // pred_fallthru
      _
    %v62 = vld [vmem:[%s0] sm:$0xff]
    %v63 = vld [vmem:[%s0 + $0x8] sm:$0xff]
    %v64 = vld [vmem:[%s0 + $0x10] sm:$0xff]
    %v65 = vpack.c.bf16 %v63, %v62
    %v66 = vpack.c.bf16 %v64, %v64
    %v67 = vld [vmem:[#allocation2] sm:$0xf]
    %v68 = vld [vmem:[#allocation2 + $0x4] sm:$0xf]
    %v69 = vld [vmem:[#allocation2 + $0x8] sm:$0xf]
    %v70 = vld [vmem:[#allocation2 + $0xc] sm:$0xf]
    %v71 = vld [vmem:[%s2] sm:$0x1]
    %v73 = vlaneseq
    %v74 = vshrl.u32 %v73, 7
    %v75 = vsub.s32 0, %v74
    %v76 = vrot.slane %v71, %v75
    %v82 = vunpack.c.l.b16 %v67
    %v83 = vunpack.c.l.b16 %v68
    %v84 = vunpack.c.l.b16 %v69
    %v85 = vunpack.c.l.b16 %v70
    %v86 = vpack.c.b16 %v83, %v82
    %v87 = vpack.c.b16 %v85, %v84
    %vm90 = vcmask 261120
    %v92 = vsel %vm90, %v65, 0
    %v95 = vsel %vm90, %v66, 0
    %97 = vmatprep.subr.bf16.mxu0 0
    %98 = vmatpush1.bf16.msra.mxu0 0
    %99 = vmatprep.subr.bf16.mxu0 0
    %100 = vmatpush1.bf16.msra.mxu0 0
    %101 = vmatprep.subr.bf16.mxu0 0
    %102 = vmatpush1.bf16.msra.mxu0 0
    %103 = vmatprep.subr.bf16.mxu0 0
    %104 = vmatpush1.bf16.msra.mxu0 0
    %105 = vmatprep.subr.bf16.mxu0 0
    %106 = vmatpush1.bf16.msra.mxu0 0
    %107 = vmatprep.subr.bf16.mxu0 0
    %108 = vmatpush1.bf16.msra.mxu0 0
    %109 = vmatprep.subr.bf16.mxu0 0
    %110 = vmatpush1.bf16.msra.mxu0 %v87
    %111 = vmatprep.subr.bf16.mxu0 0
    %112 = vmatpush1.bf16.msra.mxu0 %v86
    %113 = vmatprep.subr.bf16.mxu0 0
    %114 = vmatpush2.bf16.msra.mxu0 0
    %115 = vmatprep.subr.bf16.mxu0 0
    %116 = vmatpush2.bf16.msra.mxu0 0
    %117 = vmatprep.subr.bf16.mxu0 0
    %118 = vmatpush2.bf16.msra.mxu0 0
    %119 = vmatprep.subr.bf16.mxu0 0
    %120 = vmatpush2.bf16.msra.mxu0 0
    %121 = vmatprep.subr.bf16.mxu0 0
    %122 = vmatpush2.bf16.msra.mxu0 0
    %123 = vmatprep.subr.bf16.mxu0 0
    %124 = vmatpush2.bf16.msra.mxu0 0
    %125 = vmatprep.subr.bf16.mxu0 0
    %126 = vmatpush2.bf16.msra.mxu0 0
    %127 = vmatprep.subr.bf16.mxu0 0
    %128 = vmatpush2.bf16.msra.mxu0 0
    %129 = vmatprep.mubr.bf16.mxu0 0
    %130 = vmatmul.mubr.bf16.gmra.mxu0 %v92
    %v131 = vpop.f32.mrf.mxu0
    %v132 = vadd.f32 %v76, %v131
    %v133 = vpop.f32.mrf.mxu0
    %v134 = vpop.f32.mrf.mxu0
    %v135 = vadd.f32 %v76, %v134
    %v136 = vpop.f32.mrf.mxu0
    %137 = vmatprep.mubr.bf16.mxu0 0
    %138 = vmatmul.mubr.bf16.gmra.mxu0 %v95
    %v139 = vpop.f32.mrf.mxu0
    %v140 = vadd.f32 %v76, %v139
    %v141 = vpop.f32.mrf.mxu0
    %v142 = vpop.f32.mrf.mxu0
    %v143 = vpop.f32.mrf.mxu0
    %144 = vdwg.mxu0
    %v145 = vmax.f32 %v132, 0.0
    %v146 = vmax.f32 %v135, 0.0
    %v147 = vmax.f32 %v140, 0.0
    %v148 = vpack.c.bf16 %v146, %v145
    %v149 = vpack.c.bf16 %v147, %v147
    %v150 = vld [vmem:[%s3] sm:$0xf]
    %v151 = vld [vmem:[%s3 + $0x4] sm:$0xf]
    %v152 = vld [vmem:[%s3 + $0x8] sm:$0xf]
    %v153 = vld [vmem:[%s3 + $0xc] sm:$0xf]
    %v154 = vld [vmem:[%s3 + $0x10] sm:$0xf]
    %v155 = vld [vmem:[%s3 + $0x14] sm:$0xf]
    %v156 = vld [vmem:[%s3 + $0x18] sm:$0xf]
    %v157 = vld [vmem:[%s3 + $0x1c] sm:$0xf]
    %v158 = vld [vmem:[%s4] sm:$0x1]
    %v160 = vlaneseq
    %v161 = vshrl.u32 %v160, 7
    %v162 = vsub.s32 0, %v161
    %v163 = vrot.slane %v158, %v162
    %v173 = vunpack.c.l.b16 %v150
    %v174 = vunpack.c.l.b16 %v151
    %v175 = vunpack.c.l.b16 %v152
    %v176 = vunpack.c.l.b16 %v153
    %v177 = vunpack.c.l.b16 %v154
    %v178 = vunpack.c.l.b16 %v155
    %v179 = vunpack.c.l.b16 %v156
    %v180 = vunpack.c.l.b16 %v157
    %v181 = vpack.c.b16 %v174, %v173
    %v182 = vpack.c.b16 %v176, %v175
    %v183 = vpack.c.b16 %v178, %v177
    %v184 = vpack.c.b16 %v180, %v179
    %vm189 = vcmask 523264
    %v191 = vsel %vm189, %v148, 0
    %v194 = vsel %vm189, %v149, 0
    %196 = vmatprep.subr.bf16.mxu0 0
    %197 = vmatpush1.bf16.msra.mxu0 0
    %198 = vmatprep.subr.bf16.mxu0 0
    %199 = vmatpush1.bf16.msra.mxu0 0
    %200 = vmatprep.subr.bf16.mxu0 0
    %201 = vmatpush1.bf16.msra.mxu0 0
    %202 = vmatprep.subr.bf16.mxu0 0
    %203 = vmatpush1.bf16.msra.mxu0 0
    %204 = vmatprep.subr.bf16.mxu0 0
    %205 = vmatpush1.bf16.msra.mxu0 %v184
    %206 = vmatprep.subr.bf16.mxu0 0
    %207 = vmatpush1.bf16.msra.mxu0 %v183
    %208 = vmatprep.subr.bf16.mxu0 0
    %209 = vmatpush1.bf16.msra.mxu0 %v182
    %210 = vmatprep.subr.bf16.mxu0 0
    %211 = vmatpush1.bf16.msra.mxu0 %v181
    %212 = vmatprep.subr.bf16.mxu0 0
    %213 = vmatpush2.bf16.msra.mxu0 0
    %214 = vmatprep.subr.bf16.mxu0 0
    %215 = vmatpush2.bf16.msra.mxu0 0
    %216 = vmatprep.subr.bf16.mxu0 0
    %217 = vmatpush2.bf16.msra.mxu0 0
    %218 = vmatprep.subr.bf16.mxu0 0
    %219 = vmatpush2.bf16.msra.mxu0 0
    %220 = vmatprep.subr.bf16.mxu0 0
    %221 = vmatpush2.bf16.msra.mxu0 0
    %222 = vmatprep.subr.bf16.mxu0 0
    %223 = vmatpush2.bf16.msra.mxu0 0
    %224 = vmatprep.subr.bf16.mxu0 0
    %225 = vmatpush2.bf16.msra.mxu0 0
    %226 = vmatprep.subr.bf16.mxu0 0
    %227 = vmatpush2.bf16.msra.mxu0 0
    %228 = vmatprep.mubr.bf16.mxu0 0
    %229 = vmatmul.mubr.bf16.gmra.mxu0 %v191
    %v230 = vpop.f32.mrf.mxu0
    %v231 = vadd.f32 %v163, %v230
    %v232 = vpop.f32.mrf.mxu0
    %v233 = vpop.f32.mrf.mxu0
    %v234 = vadd.f32 %v163, %v233
    %v235 = vpop.f32.mrf.mxu0
    %236 = vmatprep.mubr.bf16.mxu0 0
    %237 = vmatmul.mubr.bf16.gmra.mxu0 %v194
    %v238 = vpop.f32.mrf.mxu0
    %v239 = vadd.f32 %v163, %v238
    %v240 = vpop.f32.mrf.mxu0
    %v241 = vpop.f32.mrf.mxu0
    %v242 = vpop.f32.mrf.mxu0
    %243 = vdwg.mxu0
    %v244 = vmax.f32 %v231, 0.0
    %v245 = vmax.f32 %v234, 0.0
    %v246 = vmax.f32 %v239, 0.0
    %v247 = vpack.c.bf16 %v245, %v244
    %v248 = vpack.c.bf16 %v246, %v246
    %v249 = vld [vmem:[#allocation5] sm:$0xf]
    %v250 = vld [vmem:[#allocation5 + $0x4] sm:$0xf]
    %v251 = vld [vmem:[#allocation5 + $0x8] sm:$0xf]
    %v252 = vld [vmem:[#allocation5 + $0xc] sm:$0xf]
    %v253 = vld [vmem:[%s6] sm:$0x1]
    %v255 = vlaneseq
    %v256 = vshrl.u32 %v255, 7
    %v257 = vsub.s32 0, %v256
    %v258 = vrot.slane %v253, %v257
    %v264 = vunpack.c.l.b16 %v249
    %v265 = vunpack.c.l.b16 %v250
    %v266 = vunpack.c.l.b16 %v251
    %v267 = vunpack.c.l.b16 %v252
    %v268 = vpack.c.b16 %v265, %v264
    %v269 = vpack.c.b16 %v267, %v266
    %v273 = vsel %vm90, %v247, 0
    %v276 = vsel %vm90, %v248, 0
    %278 = vmatprep.subr.bf16.mxu0 0
    %279 = vmatpush1.bf16.msra.mxu0 0
    %280 = vmatprep.subr.bf16.mxu0 0
    %281 = vmatpush1.bf16.msra.mxu0 0
    %282 = vmatprep.subr.bf16.mxu0 0
    %283 = vmatpush1.bf16.msra.mxu0 0
    %284 = vmatprep.subr.bf16.mxu0 0
    %285 = vmatpush1.bf16.msra.mxu0 0
    %286 = vmatprep.subr.bf16.mxu0 0
    %287 = vmatpush1.bf16.msra.mxu0 0
    %288 = vmatprep.subr.bf16.mxu0 0
    %289 = vmatpush1.bf16.msra.mxu0 0
    %290 = vmatprep.subr.bf16.mxu0 0
    %291 = vmatpush1.bf16.msra.mxu0 %v269
    %292 = vmatprep.subr.bf16.mxu0 0
    %293 = vmatpush1.bf16.msra.mxu0 %v268
    %294 = vmatprep.subr.bf16.mxu0 0
    %295 = vmatpush2.bf16.msra.mxu0 0
    %296 = vmatprep.subr.bf16.mxu0 0
    %297 = vmatpush2.bf16.msra.mxu0 0
    %298 = vmatprep.subr.bf16.mxu0 0
    %299 = vmatpush2.bf16.msra.mxu0 0
    %300 = vmatprep.subr.bf16.mxu0 0
    %301 = vmatpush2.bf16.msra.mxu0 0
    %302 = vmatprep.subr.bf16.mxu0 0
    %303 = vmatpush2.bf16.msra.mxu0 0
    %304 = vmatprep.subr.bf16.mxu0 0
    %305 = vmatpush2.bf16.msra.mxu0 0
    %306 = vmatprep.subr.bf16.mxu0 0
    %307 = vmatpush2.bf16.msra.mxu0 0
    %308 = vmatprep.subr.bf16.mxu0 0
    %309 = vmatpush2.bf16.msra.mxu0 0
    %310 = vmatprep.mubr.bf16.mxu0 0
    %311 = vmatmul.mubr.bf16.gmra.mxu0 %v273
    %v312 = vpop.f32.mrf.mxu0
    %v313 = vadd.f32 %v258, %v312
    %v314 = vpop.f32.mrf.mxu0
    %v315 = vpop.f32.mrf.mxu0
    %v316 = vadd.f32 %v258, %v315
    %v317 = vpop.f32.mrf.mxu0
    %318 = vmatprep.mubr.bf16.mxu0 0
    %319 = vmatmul.mubr.bf16.gmra.mxu0 %v276
    %v320 = vpop.f32.mrf.mxu0
    %v321 = vadd.f32 %v258, %v320
    %v322 = vpop.f32.mrf.mxu0
    %v323 = vpop.f32.mrf.mxu0
    %v324 = vpop.f32.mrf.mxu0
    %325 = vdwg.mxu0
    %v326 = vmax.f32 %v313, 0.0
    %v327 = vmax.f32 %v316, 0.0
    %v328 = vmax.f32 %v321, 0.0
    %v329 = vpack.c.bf16 %v327, %v326
    %v330 = vpack.c.bf16 %v328, %v328
    %v331 = vld [vmem:[%s7] sm:$0xf]
    %v332 = vld [vmem:[%s7 + $0x4] sm:$0xf]
    %v333 = vld [vmem:[%s7 + $0x8] sm:$0xf]
    %v334 = vld [vmem:[%s7 + $0xc] sm:$0xf]
    %v335 = vld [vmem:[%s7 + $0x10] sm:$0xf]
    %v336 = vld [vmem:[%s7 + $0x14] sm:$0xf]
    %v337 = vld [vmem:[%s7 + $0x18] sm:$0xf]
    %v338 = vld [vmem:[%s7 + $0x1c] sm:$0xf]
    %v339 = vld [vmem:[%s8] sm:$0x1]
    %v341 = vlaneseq
    %v342 = vshrl.u32 %v341, 7
    %v343 = vsub.s32 0, %v342
    %v344 = vrot.slane %v339, %v343
    %v354 = vunpack.c.l.b16 %v331
    %v355 = vunpack.c.l.b16 %v332
    %v356 = vunpack.c.l.b16 %v333
    %v357 = vunpack.c.l.b16 %v334
    %v358 = vunpack.c.l.b16 %v335
    %v359 = vunpack.c.l.b16 %v336
    %v360 = vunpack.c.l.b16 %v337
    %v361 = vunpack.c.l.b16 %v338
    %v362 = vpack.c.b16 %v355, %v354
    %v363 = vpack.c.b16 %v357, %v356
    %v364 = vpack.c.b16 %v359, %v358
    %v365 = vpack.c.b16 %v361, %v360
    %v371 = vsel %vm189, %v329, 0
    %v374 = vsel %vm189, %v330, 0
    %376 = vmatprep.subr.bf16.mxu0 0
    %377 = vmatpush1.bf16.msra.mxu0 0
    %378 = vmatprep.subr.bf16.mxu0 0
    %379 = vmatpush1.bf16.msra.mxu0 0
    %380 = vmatprep.subr.bf16.mxu0 0
    %381 = vmatpush1.bf16.msra.mxu0 0
    %382 = vmatprep.subr.bf16.mxu0 0
    %383 = vmatpush1.bf16.msra.mxu0 0
    %384 = vmatprep.subr.bf16.mxu0 0
    %385 = vmatpush1.bf16.msra.mxu0 %v365
    %386 = vmatprep.subr.bf16.mxu0 0
    %387 = vmatpush1.bf16.msra.mxu0 %v364
    %388 = vmatprep.subr.bf16.mxu0 0
    %389 = vmatpush1.bf16.msra.mxu0 %v363
    %390 = vmatprep.subr.bf16.mxu0 0
    %391 = vmatpush1.bf16.msra.mxu0 %v362
    %392 = vmatprep.subr.bf16.mxu0 0
    %393 = vmatpush2.bf16.msra.mxu0 0
    %394 = vmatprep.subr.bf16.mxu0 0
    %395 = vmatpush2.bf16.msra.mxu0 0
    %396 = vmatprep.subr.bf16.mxu0 0
    %397 = vmatpush2.bf16.msra.mxu0 0
    %398 = vmatprep.subr.bf16.mxu0 0
    %399 = vmatpush2.bf16.msra.mxu0 0
    %400 = vmatprep.subr.bf16.mxu0 0
    %401 = vmatpush2.bf16.msra.mxu0 0
    %402 = vmatprep.subr.bf16.mxu0 0
    %403 = vmatpush2.bf16.msra.mxu0 0
    %404 = vmatprep.subr.bf16.mxu0 0
    %405 = vmatpush2.bf16.msra.mxu0 0
    %406 = vmatprep.subr.bf16.mxu0 0
    %407 = vmatpush2.bf16.msra.mxu0 0
    %408 = vmatprep.mubr.bf16.mxu0 0
    %409 = vmatmul.mubr.bf16.gmra.mxu0 %v371
    %v410 = vpop.f32.mrf.mxu0
    %v411 = vadd.f32 %v344, %v410
    %v412 = vpop.f32.mrf.mxu0
    %v413 = vpop.f32.mrf.mxu0
    %v414 = vadd.f32 %v344, %v413
    %v415 = vpop.f32.mrf.mxu0
    %416 = vmatprep.mubr.bf16.mxu0 0
    %417 = vmatmul.mubr.bf16.gmra.mxu0 %v374
    %v418 = vpop.f32.mrf.mxu0
    %v419 = vadd.f32 %v344, %v418
    %v420 = vpop.f32.mrf.mxu0
    %v421 = vpop.f32.mrf.mxu0
    %v422 = vpop.f32.mrf.mxu0
    %423 = vdwg.mxu0
    %v424 = vpack.c.bf16 %v414, %v411
    %v425 = vpack.c.bf16 %v419, %v419
    %v428 = vunpack.c.l.b16 %v424
    %v429 = vunpack.c.h.b16 %v424
    %v430 = vunpack.c.l.b16 %v425
    %v431 = vpack.c.b16 %v428, %v428
    %v432 = vpack.c.b16 %v429, %v429
    %v433 = vpack.c.b16 %v430, %v430
    %437 = vst [vmem:[#allocation7] sm:$0xf] %v431
    %438 = vst [vmem:[#allocation7 + $0x4] sm:$0xf] %v432
    %439 = vst [vmem:[#allocation7 + $0x8] sm:$0xf] %v433
    // Predicated region
    $region46: #{tpu_custom_call.1} parent=1 // pred_check
      _
    $region47: #{tpu_custom_call.1} parent=1 // pred_check_branch
      %441 = sbr.rel (0) target = $region49
    $region48: #{tpu_custom_call.1} parent=1 // pred_region
      %s443 = ssub.s32 192, 192
      %444 = vsyncadd [#allocation4], %s443
      %s445 = sshll.u32 [#allocation7], 4
      %s446 = int_to_ptr.vmem [resolvable:$true] %s445
      %451 = dma.vmem_to_hbm [thread:$0]  %s446, 192, %s9, [#allocation4], 64, 64, 4
    $region49: #{tpu_custom_call.1} parent=1 // pred_fallthru
      _
    // Predicated region
    $region50: #{tpu_custom_call.1} parent=1 // pred_check
      _
    $region51: #{tpu_custom_call.1} parent=1 // pred_check_branch
      %453 = sbr.rel (0) target = $region53
    $region52: #{tpu_custom_call.1} parent=1 // pred_region
      %454 = dma.done [#allocation4], 192
    $region53: #{tpu_custom_call.1} parent=1 // pred_fallthru
      _
    %455 = vsyncpa [#allocation3], 1
    %456 = vsyncpa [#allocation6], 1
    %457 = vsyncpa [#allocation4], 1

</llo_original>
